<compile_context>
chip_gen: v7x
topology: tpu7x:2x2x1
jax: 0.10.0
libtpu: 0.0.40
codegen_flags: <defaults>
</compile_context>

<pallas_src>
import jax
import jax.numpy as jnp
from jax import lax
from jax.experimental import pallas as pl
from jax.experimental.pallas import tpu as pltpu


def _self_attn_kernel(x_ref, wf_ref, wg_ref, wh_ref, o_ref, f_sc, h_sc):
    m = pl.program_id(1)
    tm = o_ref.shape[-1]

    # Hoist the f/h projections: compute once per batch element (first m-tile)
    # and carry them across the m loop in VMEM scratch ("arbitrary" axis).
    @pl.when(m == 0)
    def _():
        x_full = x_ref[0]                                         # (C, N)
        f_sc[...] = jnp.dot(wf_ref[...], x_full,
                            preferred_element_type=jnp.float32).astype(f_sc.dtype)
        h_sc[...] = jnp.dot(wh_ref[...], x_full,
                            preferred_element_type=jnp.float32).astype(h_sc.dtype)

    # g only needs this tile's columns of x (sliced from the resident x block;
    # start is TM-aligned so the lane-dim dynamic slice lowers cleanly).
    start = pl.multiple_of(m * tm, tm)
    xm = x_ref[0, :, pl.ds(start, tm)]                            # (C, TM)
    g = jnp.dot(wg_ref[...], xm,
                preferred_element_type=jnp.float32).astype(f_sc.dtype)  # (inner, TM)

    # sim = f^T @ g, expressed as a contraction over axis 0 of both operands so
    # the MXU is fed in transposed-LHS form (no XLU transpose / VMEM copy of f).
    sim = lax.dot_general(f_sc[...], g,
                          dimension_numbers=(((0,), (0,)), ((), ())),
                          preferred_element_type=jnp.float32)     # (N, TM) f32

    # softmax over torch dim=1 == axis 0 (full key axis, whole in every tile).
    mx = jnp.max(sim, axis=0, keepdims=True)
    e = jnp.exp(sim - mx)
    denom = jnp.sum(e, axis=0, keepdims=True)                     # (1, TM)
    # Exact reciprocal: denom is a single (1, TM) row, so cost is negligible;
    # keeps the f32 path tight against the reference.
    beta = e * pl.reciprocal(denom, approx=False)                 # (N, TM) f32

    o = jnp.dot(h_sc[...], beta.astype(h_sc.dtype),
                preferred_element_type=jnp.float32)               # (C, TM)
    o_ref[0] = o.astype(o_ref.dtype)


def _pick_tm(n, max_tm):
    """Largest MXU/lane-friendly m-tile that evenly divides N (no masking)."""
    if n <= max_tm:
        return n
    for tm in (512, 256, 128):
        if tm <= max_tm and n % tm == 0:
            return tm
    return n  # ragged N: fall back to a single whole-N tile (avoids masking)


def _vmem_limit_bytes(C, N, inner, tm, itemsize):
    """Conservative VMEM budget: double-buffered blocks + resident scratch."""
    x_blk = 2 * C * N * itemsize                       # x block, double-buffered
    w_blk = 2 * (2 * inner * C + C * C) * itemsize     # weights, double-buffered
    out_blk = 2 * C * tm * itemsize                    # output block
    scratch = (inner * N + C * N) * itemsize           # f_sc + h_sc carries
    interm = 2 * N * tm * 4                            # sim/beta f32 live values
    est = x_blk + w_blk + out_blk + scratch + interm
    # clamp: at least the default-ish 32 MiB, never ask past ~96 MiB
    return max(32 * 1024 * 1024, min(int(1.5 * est), 96 * 1024 * 1024))


def image_self_attention(x, wf, wg, wh, *, compute_dtype=None, max_tm=512):
    """SAGAN image self-attention forward.

    x: (B, C, H, W); wf/wg: (C//8, C); wh: (C, C)  (1x1-conv weights, no bias).
    Returns (B, C, H*W), matching the torch module's flattened output.

    compute_dtype: cast inputs/weights (e.g. jnp.bfloat16) for native-rate MXU
      matmuls; accumulation and softmax remain f32.
    max_tm: cap on the output-column tile.  Suggested: 512 on v6e (128 MiB
      VMEM), 256 on v7x (64 MiB VMEM), 128 on v5e (small scoped default).
    """
    B, C, H, W = x.shape
    N = H * W
    inner = wf.shape[0]
    if compute_dtype is not None:
        x, wf, wg, wh = (a.astype(compute_dtype) for a in (x, wf, wg, wh))
    dt = x.dtype
    x_flat = x.reshape(B, C, N)

    tm = _pick_tm(N, max_tm)
    grid = (B, N // tm)
    vmem_limit = _vmem_limit_bytes(C, N, inner, tm, jnp.dtype(dt).itemsize)

    return pl.pallas_call(
        _self_attn_kernel,
        out_shape=jax.ShapeDtypeStruct((B, C, N), dt),
        grid_spec=pltpu.PrefetchScalarGridSpec(
            num_scalar_prefetch=0,
            grid=grid,
            in_specs=[
                # x block is constant across m (same block index -> DMA'd only
                # when b changes); the kernel slices the TM columns it needs.
                pl.BlockSpec((1, C, N), lambda b, m: (b, 0, 0)),
                pl.BlockSpec((inner, C), lambda b, m: (0, 0)),     # Wf (resident)
                pl.BlockSpec((inner, C), lambda b, m: (0, 0)),     # Wg (resident)
                pl.BlockSpec((C, C), lambda b, m: (0, 0)),         # Wh (resident)
            ],
            out_specs=pl.BlockSpec((1, C, tm), lambda b, m: (b, 0, m)),
            scratch_shapes=[
                pltpu.VMEM((inner, N), dt),   # f = Wf @ x, carried across m
                pltpu.VMEM((C, N), dt),       # h = Wh @ x, carried across m
            ],
        ),
        compiler_params=pltpu.CompilerParams(
            # batch axis parallel (megacore / v7x 2 TCs); m axis arbitrary so
            # the f/h scratch legally carries across m-iterations.
            dimension_semantics=("parallel", "arbitrary"),
            vmem_limit_bytes=vmem_limit,
        ),
    )(x_flat, wf, wg, wh)


def _reference(x, wf, wg, wh):
    B, C, H, W = x.shape
    xf = x.reshape(B, C, H * W)
    f = jnp.einsum("ic,bcn->bin", wf, xf)
    g = jnp.einsum("ic,bcn->bin", wg, xf)
    h = jnp.einsum("oc,bcn->bon", wh, xf)
    sim = jnp.einsum("bin,bim->bnm", f, g)          # f^T @ g
    beta = jax.nn.softmax(sim, axis=1)              # softmax over dim=1
    return jnp.einsum("bcn,bnm->bcm", h, beta)


if __name__ == "__main__":
    # Small shapes consistent with the module (planes divisible by 8).
    # N = 16*16 = 256 -> lane-dense tiles; max_tm=128 forces the tiled-m path
    # (grid = (2, 2)) so the scratch carry + per-tile g/softmax path is tested.
    B, C, H, W = 2, 32, 16, 16
    inner = C // 8

    key = jax.random.PRNGKey(0)
    kx, kf, kg, kh = jax.random.split(key, 4)
    x = jax.random.normal(kx, (B, C, H, W), dtype=jnp.float32)
    # Conv1d(kernel_size=1, bias=False) weights: (out, in, 1) stored as (out, in).
    wf = jax.random.normal(kf, (inner, C), dtype=jnp.float32) * 0.1
    wg = jax.random.normal(kg, (inner, C), dtype=jnp.float32) * 0.1
    wh = jax.random.normal(kh, (C, C), dtype=jnp.float32) * 0.1

    ref = _reference(x, wf, wg, wh)

    # f32 path: strict check against the pure-JAX reference.
    out = jax.block_until_ready(image_self_attention(x, wf, wg, wh, max_tm=128))
    assert out.shape == (B, C, H * W)
    assert jnp.allclose(out, ref, atol=2e-4, rtol=2e-4), "f32 kernel mismatch"

    # bf16 MXU path (f32 accumulation, f32 softmax): looser tolerance.
    out_bf16 = jax.block_until_ready(
        image_self_attention(x, wf, wg, wh, compute_dtype=jnp.bfloat16, max_tm=128))
    assert jnp.allclose(out_bf16.astype(jnp.float32), ref,
                        atol=5e-2, rtol=5e-2), "bf16 kernel mismatch"

    print("KERNEL_OK")
</pallas_src>

<mosaic_0001>
module attributes {stable_mosaic.version = 11 : i64} {
  func.func @_self_attn_kernel(%arg0: i32, %arg1: i32, %arg2: memref<1x32x256xf32, #tpu.memory_space<vmem>>, %arg3: memref<4x32xf32, #tpu.memory_space<vmem>>, %arg4: memref<4x32xf32, #tpu.memory_space<vmem>>, %arg5: memref<32x32xf32, #tpu.memory_space<vmem>>, %arg6: memref<1x32x128xf32, #tpu.memory_space<vmem>>, %arg7: memref<4x256xf32, #tpu.memory_space<vmem>>, %arg8: memref<32x256xf32, #tpu.memory_space<vmem>>) attributes {dimension_semantics = [#tpu.dimension_semantics<parallel>, #tpu.dimension_semantics<arbitrary>], iteration_bounds = array<i64: 2, 2>, scalar_prefetch = 0 : i64, scratch_operands = 2 : i64, tpu.core_type = #tpu.core_type<tc>, window_params = [{transform_indices = @transform_0, window_bounds = array<i64: 1, 32, 256>}, {pipeline_mode = #tpu.pipeline_mode<synchronous>, transform_indices = @transform_1, window_bounds = array<i64: 4, 32>}, {pipeline_mode = #tpu.pipeline_mode<synchronous>, transform_indices = @transform_2, window_bounds = array<i64: 4, 32>}, {pipeline_mode = #tpu.pipeline_mode<synchronous>, transform_indices = @transform_3, window_bounds = array<i64: 32, 32>}, {transform_indices = @transform_4, window_bounds = array<i64: 1, 32, 128>}]} {
    %c0_i32 = arith.constant 0 : i32
    %0 = arith.cmpi eq, %arg1, %c0_i32 : i32
    %1 = arith.extui %0 : i1 to i32
    %c0_i32_0 = arith.constant 0 : i32
    %2 = arith.cmpi ne, %1, %c0_i32_0 : i32
    scf.if %2 {
      %c0_15 = arith.constant 0 : index
      %c0_16 = arith.constant 0 : index
      %c0_17 = arith.constant 0 : index
      %27 = vector.load %arg2[%c0_15, %c0_16, %c0_17] : memref<1x32x256xf32, #tpu.memory_space<vmem>>, vector<1x32x256xf32>
      %28 = vector.shape_cast %27 : vector<1x32x256xf32> to vector<32x256xf32>
      %c0_18 = arith.constant 0 : index
      %c0_19 = arith.constant 0 : index
      %29 = vector.load %arg3[%c0_18, %c0_19] : memref<4x32xf32, #tpu.memory_space<vmem>>, vector<4x32xf32>
      %cst_20 = arith.constant dense<0.000000e+00> : vector<4x256xf32>
      %30 = tpu.matmul %29, %28, %cst_20 {dimension_numbers = #tpu.dot_dimension_numbers<[1], [0], [0], [1], [0, 0, 1, 1], [], []>} : vector<4x32xf32>, vector<32x256xf32>, vector<4x256xf32> -> vector<4x256xf32>
      %c0_21 = arith.constant 0 : index
      %c0_22 = arith.constant 0 : index
      %31 = vector.load %arg7[%c0_21, %c0_22] : memref<4x256xf32, #tpu.memory_space<vmem>>, vector<4x256xf32>
      tpu.vector_store %arg7[%c0_21, %c0_22], %30 {strides = array<i32>} : memref<4x256xf32, #tpu.memory_space<vmem>>, vector<4x256xf32>,
      %c0_23 = arith.constant 0 : index
      %c0_24 = arith.constant 0 : index
      %32 = vector.load %arg5[%c0_23, %c0_24] : memref<32x32xf32, #tpu.memory_space<vmem>>, vector<32x32xf32>
      %cst_25 = arith.constant dense<0.000000e+00> : vector<32x256xf32>
      %33 = tpu.matmul %32, %28, %cst_25 {dimension_numbers = #tpu.dot_dimension_numbers<[1], [0], [0], [1], [0, 0, 1, 1], [], []>} : vector<32x32xf32>, vector<32x256xf32>, vector<32x256xf32> -> vector<32x256xf32>
      %c0_26 = arith.constant 0 : index
      %c0_27 = arith.constant 0 : index
      %34 = vector.load %arg8[%c0_26, %c0_27] : memref<32x256xf32, #tpu.memory_space<vmem>>, vector<32x256xf32>
      tpu.vector_store %arg8[%c0_26, %c0_27], %33 {strides = array<i32>} : memref<32x256xf32, #tpu.memory_space<vmem>>, vector<32x256xf32>,
    } else {
    }
    %c128_i32 = arith.constant 128 : i32
    %3 = arith.muli %arg1, %c128_i32 : i32
    %4 = tpu.assume_multiple %3, 128 : i32
    %c0 = arith.constant 0 : index
    %c0_1 = arith.constant 0 : index
    %5 = arith.index_cast %4 : i32 to index
    %6 = vector.load %arg2[%c0, %c0_1, %5] : memref<1x32x256xf32, #tpu.memory_space<vmem>>, vector<1x32x128xf32>
    %7 = vector.shape_cast %6 : vector<1x32x128xf32> to vector<32x128xf32>
    %c0_2 = arith.constant 0 : index
    %c0_3 = arith.constant 0 : index
    %8 = vector.load %arg4[%c0_2, %c0_3] : memref<4x32xf32, #tpu.memory_space<vmem>>, vector<4x32xf32>
    %cst = arith.constant dense<0.000000e+00> : vector<4x128xf32>
    %9 = tpu.matmul %8, %7, %cst {dimension_numbers = #tpu.dot_dimension_numbers<[1], [0], [0], [1], [0, 0, 1, 1], [], []>} : vector<4x32xf32>, vector<32x128xf32>, vector<4x128xf32> -> vector<4x128xf32>
    %c0_4 = arith.constant 0 : index
    %c0_5 = arith.constant 0 : index
    %10 = vector.load %arg7[%c0_4, %c0_5] : memref<4x256xf32, #tpu.memory_space<vmem>>, vector<4x256xf32>
    %cst_6 = arith.constant dense<0.000000e+00> : vector<256x128xf32>
    %11 = tpu.matmul %10, %9, %cst_6 {dimension_numbers = #tpu.dot_dimension_numbers<[0], [0], [1], [1], [0, 1, 1, 1], [], []>} : vector<4x256xf32>, vector<4x128xf32>, vector<256x128xf32> -> vector<256x128xf32>
    %cst_7 = arith.constant dense<0xFF800000> : vector<128xf32>
    %12 = vector.multi_reduction <maximumf>, %11, %cst_7 [0] : vector<256x128xf32> to vector<128xf32>
    %13 = vector.shape_cast %12 : vector<128xf32> to vector<1x128xf32>
    %14 = vector.broadcast %13 : vector<1x128xf32> to vector<256x128xf32>
    %15 = arith.subf %11, %14 : vector<256x128xf32>
    %16 = math.exp %15 : vector<256x128xf32>
    %cst_8 = arith.constant dense<0.000000e+00> : vector<128xf32>
    %17 = vector.multi_reduction <add>, %16, %cst_8 [0] : vector<256x128xf32> to vector<128xf32>
    %18 = vector.shape_cast %17 : vector<128xf32> to vector<1x128xf32>
    %19 = tpu.reciprocal %18 : vector<1x128xf32> -> vector<1x128xf32>
    %20 = vector.broadcast %19 : vector<1x128xf32> to vector<256x128xf32>
    %21 = arith.mulf %16, %20 : vector<256x128xf32>
    %c0_9 = arith.constant 0 : index
    %c0_10 = arith.constant 0 : index
    %22 = vector.load %arg8[%c0_9, %c0_10] : memref<32x256xf32, #tpu.memory_space<vmem>>, vector<32x256xf32>
    %cst_11 = arith.constant dense<0.000000e+00> : vector<32x128xf32>
    %23 = tpu.matmul %22, %21, %cst_11 {dimension_numbers = #tpu.dot_dimension_numbers<[1], [0], [0], [1], [0, 0, 1, 1], [], []>} : vector<32x256xf32>, vector<256x128xf32>, vector<32x128xf32> -> vector<32x128xf32>
    %c0_12 = arith.constant 0 : index
    %c0_13 = arith.constant 0 : index
    %c0_14 = arith.constant 0 : index
    %24 = vector.load %arg6[%c0_12, %c0_13, %c0_14] : memref<1x32x128xf32, #tpu.memory_space<vmem>>, vector<1x32x128xf32>
    %25 = vector.shape_cast %24 : vector<1x32x128xf32> to vector<32x128xf32>
    %26 = vector.shape_cast %23 : vector<32x128xf32> to vector<1x32x128xf32>
    tpu.vector_store %arg6[%c0_12, %c0_13, %c0_14], %26 {strides = array<i32>} : memref<1x32x128xf32, #tpu.memory_space<vmem>>, vector<1x32x128xf32>,
    return
  }
  func.func @transform_0(%arg0: i32, %arg1: i32) -> (i32, i32, i32) {
    %c0_i32 = arith.constant 0 : i32
    %c0_i32_0 = arith.constant 0 : i32
    %c0_i32_1 = arith.constant 0 : i32
    return %arg0, %c0_i32, %c0_i32_0 : i32, i32, i32
  }
  func.func @transform_1(%arg0: i32, %arg1: i32) -> (i32, i32) {
    %c0_i32 = arith.constant 0 : i32
    %c0_i32_0 = arith.constant 0 : i32
    %c0_i32_1 = arith.constant 0 : i32
    return %c0_i32, %c0_i32_0 : i32, i32
  }
  func.func @transform_2(%arg0: i32, %arg1: i32) -> (i32, i32) {
    %c0_i32 = arith.constant 0 : i32
    %c0_i32_0 = arith.constant 0 : i32
    %c0_i32_1 = arith.constant 0 : i32
    return %c0_i32, %c0_i32_0 : i32, i32
  }
  func.func @transform_3(%arg0: i32, %arg1: i32) -> (i32, i32) {
    %c0_i32 = arith.constant 0 : i32
    %c0_i32_0 = arith.constant 0 : i32
    %c0_i32_1 = arith.constant 0 : i32
    return %c0_i32, %c0_i32_0 : i32, i32
  }
  func.func @transform_4(%arg0: i32, %arg1: i32) -> (i32, i32, i32) {
    %c0_i32 = arith.constant 0 : i32
    %c0_i32_0 = arith.constant 0 : i32
    return %arg0, %c0_i32, %arg1 : i32, i32, i32
  }
}

</mosaic_0001>

<llo_original>
// kernel: tpu_custom_call.1
$region0: #{tpu_custom_call.1}
  #allocation0 [shape = 'u32[]', space=smem, size = 0x4, offset = 0x4, fixed_abs, tag = 'smem constant byte address 0x4 - core index']
  #allocation1 [shape = 'u32[144,128]{1,0:T(1,128)}', space=vmem, size = 0x12000, scoped, tag = 'internal scratch']
  #allocation2 [shape = 'f32[4,256]{1,0:T(4,128)}', space=vmem, size = 0x1000, scoped, tag = 'scratch operand']
  #allocation3 [shape = 'f32[32,256]{1,0:T(8,128)}', space=vmem, size = 0x8000, scoped, tag = 'scratch operand']
  %s0 = inlined_call_operand.hbm [shape: f32[2,32,256], index: 0, kind: input, shape index: {}]
  %s1 = inlined_call_operand.hbm [shape: f32[4,32], index: 1, kind: input, shape index: {}]
  %s2 = inlined_call_operand.vmem [shape: f32[4,32], index: 2, kind: input, shape index: {}]
  %s3 = inlined_call_operand.hbm [shape: f32[32,32], index: 3, kind: input, shape index: {}]
  %s4 = inlined_call_operand.hbm [shape: f32[2,32,256], index: 4, kind: output, shape index: {}]
  %s5 = sld [smem:[#allocation0]]
  $region65: #{tpu_custom_call.1} parent=0
    _
  %s7 = ssub.s32 1, %s5
  %s8 = scalar_select 0, %s7, %s5
  $region1: #{tpu_custom_call.1} parent=0
    #allocation4 [shape = 'u8[65536]{0}', space=vmem, size = 0x10000, scoped, tag = 'input window, operand 0']
    #allocation5 [shape = 's32[2]{0}', space=sflag, size = 0x8, scoped, tag = 'scoped memory for tpu_custom_call.1']
    #allocation6 [shape = 's32[2]{0}', space=sflag, size = 0x8, scoped, tag = 'scoped memory for tpu_custom_call.1']
    #allocation7 [shape = 'u8[2048]{0}', space=vmem, size = 0x800, scoped, tag = 'input window, operand 1, single buffered']
    #allocation8 [shape = 's32[1]{0}', space=sflag, size = 0x4, scoped, tag = 'scoped memory for tpu_custom_call.1']
    #allocation9 [shape = 'u8[16384]{0}', space=vmem, size = 0x4000, scoped, tag = 'input window, operand 3, single buffered']
    #allocation10 [shape = 'u8[32768]{0}', space=vmem, size = 0x8000, scoped, tag = 'output window, operand 0']
    %9 = vsyncpa [#allocation5], 0
    %s10 = scalar_lea.sflag [#allocation5], 1
    %11 = vsyncpa %s10, 0
    %12 = vsyncpa [#allocation8], 0
    %13 = vsyncpa [#allocation6], 0
    %s14 = scalar_lea.sflag [#allocation6], 1
    %15 = vsyncpa %s14, 0
    loop: start=0, step=1, limit=6
    $region2: #{tpu_custom_call.1} parent=1 // loop_pre_header
      _
    $region3: #{tpu_custom_call.1} parent=1 // loop_header
      %s17 = sphi 0, %s21
      %p18 = scmp.ge.s32.totalorder %s17, 6
      %s24 = sphi 0, %s36
      %s25 = sphi 0, %s32
      %s26 = sphi 0, %s24
      %s27 = sphi 0, %s25
      %s28 = sphi 0, %s26
      %s29 = sphi 0, %s27
      %s39 = sphi 0, %s41
      %s42 = sphi 0, %s39
      %s43 = sphi 0, %s42
      %s59 = sphi 0, %s43
      %s63 = sphi 0, %s63
      %s65 = sphi 0, %s63
      %s66 = sphi 0, %s65
      %s80 = sphi 0, %s66
      %s84 = sphi 0, %s84
      %s86 = sphi 0, %s84
      %s87 = sphi 0, %s86
      %s101 = sphi 0, %s87
      %s105 = sphi 0, %s105
      %s107 = sphi 0, %s105
      %s108 = sphi 0, %s107
      %s122 = sphi 0, %s108
      %s130 = sphi 0, %s132
      %s133 = sphi 0, %s130
      %s134 = sphi 0, %s133
      %s150 = sphi 0, %s134
    $region4: #{tpu_custom_call.1} parent=1 // loop_header_branch
      %20 = sbr.rel (%p18) target = $region8
    $region5: #{tpu_custom_call.1} parent=1 // loop_body
      %s22 = ssub.s32 %s17, 1
      %s23 = ssub.s32 %s17, 2
      %s30 = sadd.s32 1, %s25
      %p31 = scmp.ge.s32.totalorder %s30, 2
      %s32 = scalar_select %p31, 0, %s30
      %s33 = sadd.s32 1, %s24
      %s34 = scalar_select %p31, %s33, %s24
      %p35 = scmp.ge.s32.totalorder %s34, 2
      %s36 = scalar_select %p35, 0, %s34
      %s37 = ssub.s32 %s24, %s36
      %p38 = scmp.eq.s32.totalorder %s37, 0
      %s40 = sadd.s32 %s39, 1
      %s41 = scalar_select %p38, %s39, %s40
      %p44 = pneg %p38
      %p45 = scmp.eq.s32.totalorder %s17, 3
      %p46 = por %p44, %p45
      %p47 = scmp.ne.s32.totalorder %s39, %s42
      %p48 = scmp.eq.s32.totalorder %s17, 0
      %p49 = por %p47, %p48
      %p50 = scmp.ne.s32.totalorder %s39, %s42
      %p51 = scmp.eq.s32.totalorder %s22, 3
      %p52 = por %p50, %p51
      %p53 = scmp.ne.s32.totalorder %s42, %s43
      %p54 = scmp.eq.s32.totalorder %s22, 0
      %p55 = por %p53, %p54
      %p56 = scmp.ne.s32.totalorder %s42, %s43
      %p57 = scmp.eq.s32.totalorder %s23, 3
      %p58 = por %p56, %p57
      %p60 = scmp.ne.s32.totalorder %s43, %s59
      %p61 = scmp.eq.s32.totalorder %s23, 0
      %p62 = por %p60, %p61
      %s64 = sadd.s32 %s63, 1
      %p67 = scmp.eq.s32.totalorder %s17, 3
      %p68 = scmp.ne.s32.totalorder %s63, %s65
      %p69 = scmp.eq.s32.totalorder %s17, 0
      %p70 = por %p68, %p69
      %p71 = scmp.ne.s32.totalorder %s63, %s65
      %p72 = scmp.eq.s32.totalorder %s22, 3
      %p73 = por %p71, %p72
      %p74 = scmp.ne.s32.totalorder %s65, %s66
      %p75 = scmp.eq.s32.totalorder %s22, 0
      %p76 = por %p74, %p75
      %p77 = scmp.ne.s32.totalorder %s65, %s66
      %p78 = scmp.eq.s32.totalorder %s23, 3
      %p79 = por %p77, %p78
      %p81 = scmp.ne.s32.totalorder %s66, %s80
      %p82 = scmp.eq.s32.totalorder %s23, 0
      %p83 = por %p81, %p82
      %s85 = sadd.s32 %s84, 1
      %p88 = scmp.eq.s32.totalorder %s17, 3
      %p89 = scmp.ne.s32.totalorder %s84, %s86
      %p90 = scmp.eq.s32.totalorder %s17, 0
      %p91 = por %p89, %p90
      %p92 = scmp.ne.s32.totalorder %s84, %s86
      %p93 = scmp.eq.s32.totalorder %s22, 3
      %p94 = por %p92, %p93
      %p95 = scmp.ne.s32.totalorder %s86, %s87
      %p96 = scmp.eq.s32.totalorder %s22, 0
      %p97 = por %p95, %p96
      %p98 = scmp.ne.s32.totalorder %s86, %s87
      %p99 = scmp.eq.s32.totalorder %s23, 3
      %p100 = por %p98, %p99
      %p102 = scmp.ne.s32.totalorder %s87, %s101
      %p103 = scmp.eq.s32.totalorder %s23, 0
      %p104 = por %p102, %p103
      %s106 = sadd.s32 %s105, 1
      %p109 = scmp.eq.s32.totalorder %s17, 3
      %p110 = scmp.ne.s32.totalorder %s105, %s107
      %p111 = scmp.eq.s32.totalorder %s17, 0
      %p112 = por %p110, %p111
      %p113 = scmp.ne.s32.totalorder %s105, %s107
      %p114 = scmp.eq.s32.totalorder %s22, 3
      %p115 = por %p113, %p114
      %p116 = scmp.ne.s32.totalorder %s107, %s108
      %p117 = scmp.eq.s32.totalorder %s22, 0
      %p118 = por %p116, %p117
      %p119 = scmp.ne.s32.totalorder %s107, %s108
      %p120 = scmp.eq.s32.totalorder %s23, 3
      %p121 = por %p119, %p120
      %p123 = scmp.ne.s32.totalorder %s108, %s122
      %p124 = scmp.eq.s32.totalorder %s23, 0
      %p125 = por %p123, %p124
      %s126 = ssub.s32 %s24, %s36
      %s127 = ssub.s32 %s25, %s32
      %s128 = sor.u32 %s126, %s127
      %p129 = scmp.eq.s32.totalorder %s128, 0
      %s131 = sadd.s32 %s130, 1
      %s132 = scalar_select %p129, %s130, %s131
      %p135 = pneg %p129
      %p136 = scmp.eq.s32.totalorder %s17, 3
      %p137 = por %p135, %p136
      %p138 = scmp.ne.s32.totalorder %s130, %s133
      %p139 = scmp.eq.s32.totalorder %s17, 0
      %p140 = por %p138, %p139
      %p141 = scmp.ne.s32.totalorder %s130, %s133
      %p142 = scmp.eq.s32.totalorder %s22, 3
      %p143 = por %p141, %p142
      %p144 = scmp.ne.s32.totalorder %s133, %s134
      %p145 = scmp.eq.s32.totalorder %s22, 0
      %p146 = por %p144, %p145
      %p147 = scmp.ne.s32.totalorder %s133, %s134
      %p148 = scmp.eq.s32.totalorder %s23, 3
      %p149 = por %p147, %p148
      %p151 = scmp.ne.s32.totalorder %s134, %s150
      %p152 = scmp.eq.s32.totalorder %s23, 0
      %p153 = por %p151, %p152
      %p154 = scmp.le.s32.totalorder 1, %s17
      %p155 = scmp.lt.s32.totalorder %s17, 5
      %p156 = pnand %p154, %p155
      %p157 = pneg %p156
      // Predicated region
      $region9: #{tpu_custom_call.1} parent=5 // pred_check
        _
      $region10: #{tpu_custom_call.1} parent=5 // pred_check_branch
        %159 = sbr.rel (%p156) target = $region12
      $region11: #{tpu_custom_call.1} parent=5 // pred_region
        %s160 = ssub.s32 %s17, 1
        // Predicated region
        $region13: #{tpu_custom_call.1} parent=11 // pred_check
          %p161 = pneg %p76
        $region14: #{tpu_custom_call.1} parent=11 // pred_check_branch
          %163 = sbr.rel (%p161) target = $region16
        $region15: #{tpu_custom_call.1} parent=11 // pred_region
          %s165 = ssub.s32 64, 64
          %166 = vsyncadd [#allocation8], %s165
          %s168 = sshll.u32 [#allocation7], 4
          %s169 = int_to_ptr.vmem [resolvable:$true] %s168
          %171 = dma.hbm_to_vmem [thread:$0]  %s1, 64, %s169, [#allocation8]
        $region16: #{tpu_custom_call.1} parent=11 // pred_fallthru
          _
        // Predicated region
        $region17: #{tpu_custom_call.1} parent=11 // pred_check
          %p172 = pneg %p97
        $region18: #{tpu_custom_call.1} parent=11 // pred_check_branch
          %174 = sbr.rel (%p172) target = $region20
        $region19: #{tpu_custom_call.1} parent=11 // pred_region
          _
        $region20: #{tpu_custom_call.1} parent=11 // pred_fallthru
          _
        // Predicated region
        $region21: #{tpu_custom_call.1} parent=11 // pred_check
          %p175 = pneg %p118
        $region22: #{tpu_custom_call.1} parent=11 // pred_check_branch
          %177 = sbr.rel (%p175) target = $region24
        $region23: #{tpu_custom_call.1} parent=11 // pred_region
          %s179 = ssub.s32 512, 512
          %180 = vsyncadd [#allocation8], %s179
          %s181 = sshll.u32 [#allocation9], 4
          %s182 = int_to_ptr.vmem [resolvable:$true] %s181
          %187 = dma.hbm_to_vmem [thread:$0]  %s3, 512, %s182, [#allocation8], 128, 128, 8
        $region24: #{tpu_custom_call.1} parent=11 // pred_fallthru
          _
      $region12: #{tpu_custom_call.1} parent=5 // pred_fallthru
        _
      %p188 = scmp.lt.s32.totalorder %s17, 4
      // Predicated region
      $region25: #{tpu_custom_call.1} parent=5 // pred_check
        %p189 = pneg %p188
      $region26: #{tpu_custom_call.1} parent=5 // pred_check_branch
        %191 = sbr.rel (%p189) target = $region28
      $region27: #{tpu_custom_call.1} parent=5 // pred_region
        // Predicated region
        $region29: #{tpu_custom_call.1} parent=27 // pred_check
          %p192 = pneg %p49
        $region30: #{tpu_custom_call.1} parent=27 // pred_check_branch
          %194 = sbr.rel (%p192) target = $region32
        $region31: #{tpu_custom_call.1} parent=27 // pred_region
          %s195 = sand.u32 %s39, 1
          %s196 = scalar_lea.sflag [#allocation5], %s195
          %s197 = sand.u32 %s39, 1
          %s198 = smul.addr %s197, 64
          %s199 = scalar_lea.vmem [#allocation4], %s198
          %s201 = ssub.s32 1024, 1024
          %202 = vsyncadd %s196, %s201
          %s203 = smul.addr %s24, 8
          %s204 = smul.addr %s203, 128
          %s205 = scalar_lea.hbm %s0, %s204
          %s206 = sshll.u32 %s199, 4
          %s207 = int_to_ptr.vmem [resolvable:$true] %s206
          %212 = dma.hbm_to_vmem [thread:$0]  %s205, 1024, %s207, %s196, 256, 256, 16
        $region32: #{tpu_custom_call.1} parent=27 // pred_fallthru
          _
      $region28: #{tpu_custom_call.1} parent=5 // pred_fallthru
        _
      %p213 = scmp.le.s32.totalorder 1, %s17
      %p214 = scmp.lt.s32.totalorder %s17, 5
      %p215 = pnand %p213, %p214
      %p216 = pneg %p215
      // Predicated region
      $region33: #{tpu_custom_call.1} parent=5 // pred_check
        _
      $region34: #{tpu_custom_call.1} parent=5 // pred_check_branch
        %218 = sbr.rel (%p215) target = $region36
      $region35: #{tpu_custom_call.1} parent=5 // pred_region
        %s219 = ssub.s32 %s17, 1
        %s220 = sand.u32 %s42, 1
        %s221 = scalar_lea.sflag [#allocation5], %s220
        %s222 = sand.u32 %s42, 1
        %s223 = smul.addr %s222, 64
        %s224 = scalar_lea.vmem [#allocation4], %s223
        // Predicated region
        $region37: #{tpu_custom_call.1} parent=35 // pred_check
          %p225 = pneg %p55
        $region38: #{tpu_custom_call.1} parent=35 // pred_check_branch
          %227 = sbr.rel (%p225) target = $region40
        $region39: #{tpu_custom_call.1} parent=35 // pred_region
          %228 = dma.done %s221, 1024
        $region40: #{tpu_custom_call.1} parent=35 // pred_fallthru
          _
        // Predicated region
        $region41: #{tpu_custom_call.1} parent=35 // pred_check
          %p229 = pneg %p76
        $region42: #{tpu_custom_call.1} parent=35 // pred_check_branch
          %231 = sbr.rel (%p229) target = $region44
        $region43: #{tpu_custom_call.1} parent=35 // pred_region
          %232 = dma.done [#allocation8], 64
        $region44: #{tpu_custom_call.1} parent=35 // pred_fallthru
          _
        // Predicated region
        $region45: #{tpu_custom_call.1} parent=35 // pred_check
          %p233 = pneg %p118
        $region46: #{tpu_custom_call.1} parent=35 // pred_check_branch
          %235 = sbr.rel (%p233) target = $region48
        $region47: #{tpu_custom_call.1} parent=35 // pred_region
          %236 = dma.done [#allocation8], 512
        $region48: #{tpu_custom_call.1} parent=35 // pred_fallthru
          _
        %s237 = sand.u32 %s42, 1
        %s238 = scalar_lea.sflag [#allocation5], %s237
        %s239 = sand.u32 %s42, 1
        %s240 = smul.addr %s239, 64
        %s241 = scalar_lea.vmem [#allocation4], %s240
        %p242 = pneg %p55
        %p243 = pneg %p52
        %p244 = pneg %p76
        %p245 = pneg %p73
        %p246 = pneg %p97
        %p247 = pneg %p94
        %p248 = pneg %p118
        %p249 = pneg %p115
        %p250 = pneg %p146
        %p251 = pneg %p143
        %s252 = sand.u32 %s133, 1
        %s253 = scalar_lea.sflag [#allocation6], %s252
        %s254 = sand.u32 %s133, 1
        %s255 = smul.addr %s254, 32
        %s256 = scalar_lea.vmem [#allocation10], %s255
        %p257 = scmp.eq.s32.totalorder %s27, 0
        // Predicated region
        $region49: #{tpu_custom_call.1} parent=35 // pred_check
          %p258 = pneg %p257
        $region50: #{tpu_custom_call.1} parent=35 // pred_check_branch
          %260 = sbr.rel (%p258) target = $region52
        $region51: #{tpu_custom_call.1} parent=35 // pred_region
          %v261 = vld [vmem:[%s224] sm:$0xff]
          %v262 = vld [vmem:[%s224 + $0x8] sm:$0xff]
          %v263 = vld [vmem:[%s224 + $0x10] sm:$0xff]
          %v264 = vld [vmem:[%s224 + $0x18] sm:$0xff]
          %v265 = vld [vmem:[%s224 + $0x20] sm:$0xff]
          %v266 = vld [vmem:[%s224 + $0x28] sm:$0xff]
          %v267 = vld [vmem:[%s224 + $0x30] sm:$0xff]
          %v268 = vld [vmem:[%s224 + $0x38] sm:$0xff]
          %v269 = vld [vmem:[#allocation7] sm:$0xf]
          %vm270 = vcmask 261120
          %v272 = vsel %vm270, %v269, 0
          %274 = vmatprep.subr.mxu0 %v262
          %275 = vmatpush1.msra.mxu0 %v261
          %276 = vmatprep.subr.mxu0 %v264
          %277 = vmatpush1.msra.mxu0 %v263
          %278 = vmatprep.subr.mxu0 %v266
          %279 = vmatpush1.msra.mxu0 %v265
          %280 = vmatprep.subr.mxu0 %v268
          %281 = vmatpush1.msra.mxu0 %v267
          %282 = vmatprep.subr.mxu0 0.0
          %283 = vmatpush1.msra.mxu0 0.0
          %284 = vmatprep.subr.mxu0 0.0
          %285 = vmatpush1.msra.mxu0 0.0
          %286 = vmatprep.subr.mxu0 0.0
          %287 = vmatpush1.msra.mxu0 0.0
          %288 = vmatprep.subr.mxu0 0.0
          %289 = vmatpush1.msra.mxu0 0.0
          %290 = vmatprep.subr.mxu0 0.0
          %291 = vmatpush1.msra.mxu0 0.0
          %292 = vmatprep.subr.mxu0 0.0
          %293 = vmatpush1.msra.mxu0 0.0
          %294 = vmatprep.subr.mxu0 0.0
          %295 = vmatpush1.msra.mxu0 0.0
          %296 = vmatprep.subr.mxu0 0.0
          %297 = vmatpush1.msra.mxu0 0.0
          %298 = vmatprep.subr.mxu0 0.0
          %299 = vmatpush1.msra.mxu0 0.0
          %300 = vmatprep.subr.mxu0 0.0
          %301 = vmatpush1.msra.mxu0 0.0
          %302 = vmatprep.subr.mxu0 0.0
          %303 = vmatpush1.msra.mxu0 0.0
          %304 = vmatprep.subr.mxu0 0.0
          %305 = vmatpush1.msra.mxu0 0.0
          %306 = vmatprep.subr.mxu0 0.0
          %307 = vmatpush1.msra.mxu0 0.0
          %308 = vmatprep.subr.mxu0 0.0
          %309 = vmatpush1.msra.mxu0 0.0
          %310 = vmatprep.subr.mxu0 0.0
          %311 = vmatpush1.msra.mxu0 0.0
          %312 = vmatprep.subr.mxu0 0.0
          %313 = vmatpush1.msra.mxu0 0.0
          %314 = vmatprep.subr.mxu0 0.0
          %315 = vmatpush1.msra.mxu0 0.0
          %316 = vmatprep.subr.mxu0 0.0
          %317 = vmatpush1.msra.mxu0 0.0
          %318 = vmatprep.subr.mxu0 0.0
          %319 = vmatpush1.msra.mxu0 0.0
          %320 = vmatprep.subr.mxu0 0.0
          %321 = vmatpush1.msra.mxu0 0.0
          %322 = vmatprep.subr.mxu0 0.0
          %323 = vmatpush1.msra.mxu0 0.0
          %324 = vmatprep.subr.mxu0 0.0
          %325 = vmatpush1.msra.mxu0 0.0
          %326 = vmatprep.subr.mxu0 0.0
          %327 = vmatpush1.msra.mxu0 0.0
          %328 = vmatprep.subr.mxu0 0.0
          %329 = vmatpush1.msra.mxu0 0.0
          %330 = vmatprep.subr.mxu0 0.0
          %331 = vmatpush1.msra.mxu0 0.0
          %332 = vmatprep.subr.mxu0 0.0
          %333 = vmatpush1.msra.mxu0 0.0
          %334 = vmatprep.subr.mxu0 0.0
          %335 = vmatpush1.msra.mxu0 0.0
          %336 = vmatprep.subr.mxu0 0.0
          %337 = vmatpush1.msra.mxu0 0.0
          %338 = vmatprep.mubr.f32.mxu0 0.0
          %339 = vmatmul.mubr.f32.gmra.mrb[0].mxu0 %v272
          %v340 = vpop.f32.mrb[0].mxu0
          %v341 = vadd.f32 0.0, %v340
          %v342 = vpop.f32.mrb[0].mxu0
          %v343 = vadd.f32 0.0, %v342
          %344 = vdwg.mxu0
          %v347 = vcombine.low %v341, %v343
          %349 = vst [vmem:[#allocation2] sm:$0xff] %v347
          %v350 = vld [vmem:[#allocation9] sm:$0xff]
          %v351 = vld [vmem:[#allocation9 + $0x8] sm:$0xff]
          %v352 = vld [vmem:[#allocation9 + $0x10] sm:$0xff]
          %v353 = vld [vmem:[#allocation9 + $0x18] sm:$0xff]
          %v355 = vsel %vm270, %v350, 0
          %v358 = vsel %vm270, %v351, 0
          %v361 = vsel %vm270, %v352, 0
          %v364 = vsel %vm270, %v353, 0
          %366 = vmatprep.subr.mxu0 %v262
          %367 = vmatpush1.msra.mxu0 %v261
          %368 = vmatprep.subr.mxu0 %v264
          %369 = vmatpush1.msra.mxu0 %v263
          %370 = vmatprep.subr.mxu0 %v266
          %371 = vmatpush1.msra.mxu0 %v265
          %372 = vmatprep.subr.mxu0 %v268
          %373 = vmatpush1.msra.mxu0 %v267
          %374 = vmatprep.subr.mxu0 0.0
          %375 = vmatpush1.msra.mxu0 0.0
          %376 = vmatprep.subr.mxu0 0.0
          %377 = vmatpush1.msra.mxu0 0.0
          %378 = vmatprep.subr.mxu0 0.0
          %379 = vmatpush1.msra.mxu0 0.0
          %380 = vmatprep.subr.mxu0 0.0
          %381 = vmatpush1.msra.mxu0 0.0
          %382 = vmatprep.subr.mxu0 0.0
          %383 = vmatpush1.msra.mxu0 0.0
          %384 = vmatprep.subr.mxu0 0.0
          %385 = vmatpush1.msra.mxu0 0.0
          %386 = vmatprep.subr.mxu0 0.0
          %387 = vmatpush1.msra.mxu0 0.0
          %388 = vmatprep.subr.mxu0 0.0
          %389 = vmatpush1.msra.mxu0 0.0
          %390 = vmatprep.subr.mxu0 0.0
          %391 = vmatpush1.msra.mxu0 0.0
          %392 = vmatprep.subr.mxu0 0.0
          %393 = vmatpush1.msra.mxu0 0.0
          %394 = vmatprep.subr.mxu0 0.0
          %395 = vmatpush1.msra.mxu0 0.0
          %396 = vmatprep.subr.mxu0 0.0
          %397 = vmatpush1.msra.mxu0 0.0
          %398 = vmatprep.subr.mxu0 0.0
          %399 = vmatpush1.msra.mxu0 0.0
          %400 = vmatprep.subr.mxu0 0.0
          %401 = vmatpush1.msra.mxu0 0.0
          %402 = vmatprep.subr.mxu0 0.0
          %403 = vmatpush1.msra.mxu0 0.0
          %404 = vmatprep.subr.mxu0 0.0
          %405 = vmatpush1.msra.mxu0 0.0
          %406 = vmatprep.subr.mxu0 0.0
          %407 = vmatpush1.msra.mxu0 0.0
          %408 = vmatprep.subr.mxu0 0.0
          %409 = vmatpush1.msra.mxu0 0.0
          %410 = vmatprep.subr.mxu0 0.0
          %411 = vmatpush1.msra.mxu0 0.0
          %412 = vmatprep.subr.mxu0 0.0
          %413 = vmatpush1.msra.mxu0 0.0
          %414 = vmatprep.subr.mxu0 0.0
          %415 = vmatpush1.msra.mxu0 0.0
          %416 = vmatprep.subr.mxu0 0.0
          %417 = vmatpush1.msra.mxu0 0.0
          %418 = vmatprep.subr.mxu0 0.0
          %419 = vmatpush1.msra.mxu0 0.0
          %420 = vmatprep.subr.mxu0 0.0
          %421 = vmatpush1.msra.mxu0 0.0
          %422 = vmatprep.subr.mxu0 0.0
          %423 = vmatpush1.msra.mxu0 0.0
          %424 = vmatprep.subr.mxu0 0.0
          %425 = vmatpush1.msra.mxu0 0.0
          %426 = vmatprep.subr.mxu0 0.0
          %427 = vmatpush1.msra.mxu0 0.0
          %428 = vmatprep.subr.mxu0 0.0
          %429 = vmatpush1.msra.mxu0 0.0
          %430 = vmatprep.mubr.f32.mxu0 0.0
          %431 = vmatmul.mubr.f32.gmra.mrb[0].mxu0 %v355
          %v432 = vpop.f32.mrb[0].mxu0
          %v433 = vadd.f32 0.0, %v432
          %v434 = vpop.f32.mrb[0].mxu0
          %v435 = vadd.f32 0.0, %v434
          %436 = vmatprep.mubr.f32.mxu0 0.0
          %437 = vmatmul.mubr.f32.gmra.mrb[0].mxu0 %v358
          %v438 = vpop.f32.mrb[0].mxu0
          %v439 = vadd.f32 0.0, %v438
          %v440 = vpop.f32.mrb[0].mxu0
          %v441 = vadd.f32 0.0, %v440
          %442 = vmatprep.mubr.f32.mxu0 0.0
          %443 = vmatmul.mubr.f32.gmra.mrb[0].mxu0 %v361
          %v444 = vpop.f32.mrb[0].mxu0
          %v445 = vadd.f32 0.0, %v444
          %v446 = vpop.f32.mrb[0].mxu0
          %v447 = vadd.f32 0.0, %v446
          %448 = vmatprep.mubr.f32.mxu0 0.0
          %449 = vmatmul.mubr.f32.gmra.mrb[0].mxu0 %v364
          %v450 = vpop.f32.mrb[0].mxu0
          %v451 = vadd.f32 0.0, %v450
          %v452 = vpop.f32.mrb[0].mxu0
          %v453 = vadd.f32 0.0, %v452
          %454 = vdwg.mxu0
          %455 = vst [vmem:[#allocation3] sm:$0xff] %v433
          %456 = vst [vmem:[#allocation3 + $0x8] sm:$0xff] %v435
          %457 = vst [vmem:[#allocation3 + $0x10] sm:$0xff] %v439
          %458 = vst [vmem:[#allocation3 + $0x18] sm:$0xff] %v441
          %459 = vst [vmem:[#allocation3 + $0x20] sm:$0xff] %v445
          %460 = vst [vmem:[#allocation3 + $0x28] sm:$0xff] %v447
          %461 = vst [vmem:[#allocation3 + $0x30] sm:$0xff] %v451
          %462 = vst [vmem:[#allocation3 + $0x38] sm:$0xff] %v453
        $region52: #{tpu_custom_call.1} parent=35 // pred_fallthru
          _
        %s463 = smul.u32 %s27, 128
        %s464 = sshra.s32 %s463, 7
        %s465 = sand.u32 %s463, 127
        %s466 = smul.addr %s464, 8
        %s467 = scalar_lea.vmem %s224, %s466 [#allocation4]
        %v468 = vld [vmem:[%s467] sm:$0xff]
        %v469 = vld [vmem:[%s467 + $0x10] sm:$0xff]
        %v470 = vld [vmem:[%s467 + $0x20] sm:$0xff]
        %v471 = vld [vmem:[%s467 + $0x30] sm:$0xff]
        %v472 = vld [vmem:[%s2] sm:$0xf]
        %vm473 = vcmask 261120
        %v475 = vsel %vm473, %v472, 0
        %477 = vmatprep.subr.mxu0 0.0
        %478 = vmatpush1.msra.mxu0 %v468
        %479 = vmatprep.subr.mxu0 0.0
        %480 = vmatpush1.msra.mxu0 %v469
        %481 = vmatprep.subr.mxu0 0.0
        %482 = vmatpush1.msra.mxu0 %v470
        %483 = vmatprep.subr.mxu0 0.0
        %484 = vmatpush1.msra.mxu0 %v471
        %485 = vmatprep.subr.mxu0 0.0
        %486 = vmatpush1.msra.mxu0 0.0
        %487 = vmatprep.subr.mxu0 0.0
        %488 = vmatpush1.msra.mxu0 0.0
        %489 = vmatprep.subr.mxu0 0.0
        %490 = vmatpush1.msra.mxu0 0.0
        %491 = vmatprep.subr.mxu0 0.0
        %492 = vmatpush1.msra.mxu0 0.0
        %493 = vmatprep.subr.mxu0 0.0
        %494 = vmatpush1.msra.mxu0 0.0
        %495 = vmatprep.subr.mxu0 0.0
        %496 = vmatpush1.msra.mxu0 0.0
        %497 = vmatprep.subr.mxu0 0.0
        %498 = vmatpush1.msra.mxu0 0.0
        %499 = vmatprep.subr.mxu0 0.0
        %500 = vmatpush1.msra.mxu0 0.0
        %501 = vmatprep.subr.mxu0 0.0
        %502 = vmatpush1.msra.mxu0 0.0
        %503 = vmatprep.subr.mxu0 0.0
        %504 = vmatpush1.msra.mxu0 0.0
        %505 = vmatprep.subr.mxu0 0.0
        %506 = vmatpush1.msra.mxu0 0.0
        %507 = vmatprep.subr.mxu0 0.0
        %508 = vmatpush1.msra.mxu0 0.0
        %509 = vmatprep.subr.mxu0 0.0
        %510 = vmatpush1.msra.mxu0 0.0
        %511 = vmatprep.subr.mxu0 0.0
        %512 = vmatpush1.msra.mxu0 0.0
        %513 = vmatprep.subr.mxu0 0.0
        %514 = vmatpush1.msra.mxu0 0.0
        %515 = vmatprep.subr.mxu0 0.0
        %516 = vmatpush1.msra.mxu0 0.0
        %517 = vmatprep.subr.mxu0 0.0
        %518 = vmatpush1.msra.mxu0 0.0
        %519 = vmatprep.subr.mxu0 0.0
        %520 = vmatpush1.msra.mxu0 0.0
        %521 = vmatprep.subr.mxu0 0.0
        %522 = vmatpush1.msra.mxu0 0.0
        %523 = vmatprep.subr.mxu0 0.0
        %524 = vmatpush1.msra.mxu0 0.0
        %525 = vmatprep.subr.mxu0 0.0
        %526 = vmatpush1.msra.mxu0 0.0
        %527 = vmatprep.subr.mxu0 0.0
        %528 = vmatpush1.msra.mxu0 0.0
        %529 = vmatprep.subr.mxu0 0.0
        %530 = vmatpush1.msra.mxu0 0.0
        %531 = vmatprep.subr.mxu0 0.0
        %532 = vmatpush1.msra.mxu0 0.0
        %533 = vmatprep.subr.mxu0 0.0
        %534 = vmatpush1.msra.mxu0 0.0
        %535 = vmatprep.subr.mxu0 0.0
        %536 = vmatpush1.msra.mxu0 0.0
        %537 = vmatprep.subr.mxu0 0.0
        %538 = vmatpush1.msra.mxu0 0.0
        %539 = vmatprep.subr.mxu0 0.0
        %540 = vmatpush1.msra.mxu0 0.0
        %541 = vmatprep.mubr.f32.mxu0 0.0
        %542 = vmatmul.mubr.f32.gmra.mrb[0].mxu0 %v475
        %v543 = vpop.f32.mrb[0].mxu0
        %v544 = vadd.f32 0.0, %v543
        %v545 = vpop.f32.mrb[0].mxu0
        %546 = vdwg.mxu0
        %v547 = vld [vmem:[#allocation2] sm:$0xff]
        %v549 = vcombine.high %v547, %v547
        %551 = vxpose.xlu0.b32.start [1/16] %v547, 128
        %552 = vxpose.xlu0.b32.cont [2/16] 0.0, 128
        %553 = vxpose.xlu0.b32.cont [3/16] 0.0, 128
        %554 = vxpose.xlu0.b32.cont [4/16] 0.0, 128
        %555 = vxpose.xlu0.b32.cont [5/16] 0.0, 128
        %556 = vxpose.xlu0.b32.cont [6/16] 0.0, 128
        %557 = vxpose.xlu0.b32.cont [7/16] 0.0, 128
        %558 = vxpose.xlu0.b32.cont [8/16] 0.0, 128
        %559 = vxpose.xlu0.b32.cont [9/16] 0.0, 128
        %560 = vxpose.xlu0.b32.cont [10/16] 0.0, 128
        %561 = vxpose.xlu0.b32.cont [11/16] 0.0, 128
        %562 = vxpose.xlu0.b32.cont [12/16] 0.0, 128
        %563 = vxpose.xlu0.b32.cont [13/16] 0.0, 128
        %564 = vxpose.xlu0.b32.cont [14/16] 0.0, 128
        %565 = vxpose.xlu0.b32.cont [15/16] 0.0, 128
        %566 = vxpose.xlu0.b32.end [16/16] 0.0, 128
        %v567 = vpop.trf.xlu0
        %v568 = vpop.trf.xlu0
        %v569 = vpop.trf.xlu0
        %v570 = vpop.trf.xlu0
        %v571 = vpop.trf.xlu0
        %v572 = vpop.trf.xlu0
        %v573 = vpop.trf.xlu0
        %v574 = vpop.trf.xlu0
        %v575 = vpop.trf.xlu0
        %v576 = vpop.trf.xlu0
        %v577 = vpop.trf.xlu0
        %v578 = vpop.trf.xlu0
        %v579 = vpop.trf.xlu0
        %v580 = vpop.trf.xlu0
        %v581 = vpop.trf.xlu0
        %v582 = vpop.trf.xlu0
        %583 = vxpose.xlu0.b32.start [1/16] %v549, 128
        %584 = vxpose.xlu0.b32.cont [2/16] 0.0, 128
        %585 = vxpose.xlu0.b32.cont [3/16] 0.0, 128
        %586 = vxpose.xlu0.b32.cont [4/16] 0.0, 128
        %587 = vxpose.xlu0.b32.cont [5/16] 0.0, 128
        %588 = vxpose.xlu0.b32.cont [6/16] 0.0, 128
        %589 = vxpose.xlu0.b32.cont [7/16] 0.0, 128
        %590 = vxpose.xlu0.b32.cont [8/16] 0.0, 128
        %591 = vxpose.xlu0.b32.cont [9/16] 0.0, 128
        %592 = vxpose.xlu0.b32.cont [10/16] 0.0, 128
        %593 = vxpose.xlu0.b32.cont [11/16] 0.0, 128
        %594 = vxpose.xlu0.b32.cont [12/16] 0.0, 128
        %595 = vxpose.xlu0.b32.cont [13/16] 0.0, 128
        %596 = vxpose.xlu0.b32.cont [14/16] 0.0, 128
        %597 = vxpose.xlu0.b32.cont [15/16] 0.0, 128
        %598 = vxpose.xlu0.b32.end [16/16] 0.0, 128
        %v599 = vpop.trf.xlu0
        %v600 = vpop.trf.xlu0
        %v601 = vpop.trf.xlu0
        %v602 = vpop.trf.xlu0
        %v603 = vpop.trf.xlu0
        %v604 = vpop.trf.xlu0
        %v605 = vpop.trf.xlu0
        %v606 = vpop.trf.xlu0
        %v607 = vpop.trf.xlu0
        %v608 = vpop.trf.xlu0
        %v609 = vpop.trf.xlu0
        %v610 = vpop.trf.xlu0
        %v611 = vpop.trf.xlu0
        %v612 = vpop.trf.xlu0
        %v613 = vpop.trf.xlu0
        %v614 = vpop.trf.xlu0
        %vm615 = vcmask 31744
        %v617 = vsel %vm615, %v567, 0
        %v620 = vsel %vm615, %v568, 0
        %v623 = vsel %vm615, %v569, 0
        %v626 = vsel %vm615, %v570, 0
        %v629 = vsel %vm615, %v571, 0
        %v632 = vsel %vm615, %v572, 0
        %v635 = vsel %vm615, %v573, 0
        %v638 = vsel %vm615, %v574, 0
        %v641 = vsel %vm615, %v575, 0
        %v644 = vsel %vm615, %v576, 0
        %v647 = vsel %vm615, %v577, 0
        %v650 = vsel %vm615, %v578, 0
        %v653 = vsel %vm615, %v579, 0
        %v656 = vsel %vm615, %v580, 0
        %v659 = vsel %vm615, %v581, 0
        %v662 = vsel %vm615, %v582, 0
        %v665 = vsel %vm615, %v599, 0
        %v668 = vsel %vm615, %v600, 0
        %v671 = vsel %vm615, %v601, 0
        %v674 = vsel %vm615, %v602, 0
        %v677 = vsel %vm615, %v603, 0
        %v680 = vsel %vm615, %v604, 0
        %v683 = vsel %vm615, %v605, 0
        %v686 = vsel %vm615, %v606, 0
        %v689 = vsel %vm615, %v607, 0
        %v692 = vsel %vm615, %v608, 0
        %v695 = vsel %vm615, %v609, 0
        %v698 = vsel %vm615, %v610, 0
        %v701 = vsel %vm615, %v611, 0
        %v704 = vsel %vm615, %v612, 0
        %v707 = vsel %vm615, %v613, 0
        %v710 = vsel %vm615, %v614, 0
        %vm712 = vcmask 1043456
        %v714 = vsel %vm712, %v544, 0
        %716 = vmatprep.subr.mxu0 0.0
        %717 = vmatpush1.msra.mxu0 %v714
        %718 = vmatprep.subr.mxu0 0.0
        %719 = vmatpush1.msra.mxu0 0.0
        %720 = vmatprep.subr.mxu0 0.0
        %721 = vmatpush1.msra.mxu0 0.0
        %722 = vmatprep.subr.mxu0 0.0
        %723 = vmatpush1.msra.mxu0 0.0
        %724 = vmatprep.subr.mxu0 0.0
        %725 = vmatpush1.msra.mxu0 0.0
        %726 = vmatprep.subr.mxu0 0.0
        %727 = vmatpush1.msra.mxu0 0.0
        %728 = vmatprep.subr.mxu0 0.0
        %729 = vmatpush1.msra.mxu0 0.0
        %730 = vmatprep.subr.mxu0 0.0
        %731 = vmatpush1.msra.mxu0 0.0
        %732 = vmatprep.subr.mxu0 0.0
        %733 = vmatpush1.msra.mxu0 0.0
        %734 = vmatprep.subr.mxu0 0.0
        %735 = vmatpush1.msra.mxu0 0.0
        %736 = vmatprep.subr.mxu0 0.0
        %737 = vmatpush1.msra.mxu0 0.0
        %738 = vmatprep.subr.mxu0 0.0
        %739 = vmatpush1.msra.mxu0 0.0
        %740 = vmatprep.subr.mxu0 0.0
        %741 = vmatpush1.msra.mxu0 0.0
        %742 = vmatprep.subr.mxu0 0.0
        %743 = vmatpush1.msra.mxu0 0.0
        %744 = vmatprep.subr.mxu0 0.0
        %745 = vmatpush1.msra.mxu0 0.0
        %746 = vmatprep.subr.mxu0 0.0
        %747 = vmatpush1.msra.mxu0 0.0
        %748 = vmatprep.subr.mxu0 0.0
        %749 = vmatpush1.msra.mxu0 0.0
        %750 = vmatprep.subr.mxu0 0.0
        %751 = vmatpush1.msra.mxu0 0.0
        %752 = vmatprep.subr.mxu0 0.0
        %753 = vmatpush1.msra.mxu0 0.0
        %754 = vmatprep.subr.mxu0 0.0
        %755 = vmatpush1.msra.mxu0 0.0
        %756 = vmatprep.subr.mxu0 0.0
        %757 = vmatpush1.msra.mxu0 0.0
        %758 = vmatprep.subr.mxu0 0.0
        %759 = vmatpush1.msra.mxu0 0.0
        %760 = vmatprep.subr.mxu0 0.0
        %761 = vmatpush1.msra.mxu0 0.0
        %762 = vmatprep.subr.mxu0 0.0
        %763 = vmatpush1.msra.mxu0 0.0
        %764 = vmatprep.subr.mxu0 0.0
        %765 = vmatpush1.msra.mxu0 0.0
        %766 = vmatprep.subr.mxu0 0.0
        %767 = vmatpush1.msra.mxu0 0.0
        %768 = vmatprep.subr.mxu0 0.0
        %769 = vmatpush1.msra.mxu0 0.0
        %770 = vmatprep.subr.mxu0 0.0
        %771 = vmatpush1.msra.mxu0 0.0
        %772 = vmatprep.subr.mxu0 0.0
        %773 = vmatpush1.msra.mxu0 0.0
        %774 = vmatprep.subr.mxu0 0.0
        %775 = vmatpush1.msra.mxu0 0.0
        %776 = vmatprep.subr.mxu0 0.0
        %777 = vmatpush1.msra.mxu0 0.0
        %778 = vmatprep.subr.mxu0 0.0
        %779 = vmatpush1.msra.mxu0 0.0
        %780 = vmatprep.mubr.f32.mxu0 0.0
        %781 = vmatmul.mubr.f32.gmra.mrb[0].mxu0 %v617
        %v782 = vpop.f32.mrb[0].mxu0
        %v783 = vadd.f32 0.0, %v782
        %v784 = vpop.f32.mrb[0].mxu0
        %785 = vmatprep.mubr.f32.mxu0 0.0
        %786 = vmatmul.mubr.f32.gmra.mrb[0].mxu0 %v620
        %v787 = vpop.f32.mrb[0].mxu0
        %v788 = vadd.f32 0.0, %v787
        %v789 = vpop.f32.mrb[0].mxu0
        %790 = vmatprep.mubr.f32.mxu0 0.0
        %791 = vmatmul.mubr.f32.gmra.mrb[0].mxu0 %v623
        %v792 = vpop.f32.mrb[0].mxu0
        %v793 = vadd.f32 0.0, %v792
        %v794 = vpop.f32.mrb[0].mxu0
        %795 = vmatprep.mubr.f32.mxu0 0.0
        %796 = vmatmul.mubr.f32.gmra.mrb[0].mxu0 %v626
        %v797 = vpop.f32.mrb[0].mxu0
        %v798 = vadd.f32 0.0, %v797
        %v799 = vpop.f32.mrb[0].mxu0
        %800 = vmatprep.mubr.f32.mxu0 0.0
        %801 = vmatmul.mubr.f32.gmra.mrb[0].mxu0 %v629
        %v802 = vpop.f32.mrb[0].mxu0
        %v803 = vadd.f32 0.0, %v802
        %v804 = vpop.f32.mrb[0].mxu0
        %805 = vmatprep.mubr.f32.mxu0 0.0
        %806 = vmatmul.mubr.f32.gmra.mrb[0].mxu0 %v632
        %v807 = vpop.f32.mrb[0].mxu0
        %v808 = vadd.f32 0.0, %v807
        %v809 = vpop.f32.mrb[0].mxu0
        %810 = vmatprep.mubr.f32.mxu0 0.0
        %811 = vmatmul.mubr.f32.gmra.mrb[0].mxu0 %v635
        %v812 = vpop.f32.mrb[0].mxu0
        %v813 = vadd.f32 0.0, %v812
        %v814 = vpop.f32.mrb[0].mxu0
        %815 = vmatprep.mubr.f32.mxu0 0.0
        %816 = vmatmul.mubr.f32.gmra.mrb[0].mxu0 %v638
        %v817 = vpop.f32.mrb[0].mxu0
        %v818 = vadd.f32 0.0, %v817
        %v819 = vpop.f32.mrb[0].mxu0
        %820 = vmatprep.mubr.f32.mxu0 0.0
        %821 = vmatmul.mubr.f32.gmra.mrb[0].mxu0 %v641
        %v822 = vpop.f32.mrb[0].mxu0
        %v823 = vadd.f32 0.0, %v822
        %v824 = vpop.f32.mrb[0].mxu0
        %825 = vmatprep.mubr.f32.mxu0 0.0
        %826 = vmatmul.mubr.f32.gmra.mrb[0].mxu0 %v644
        %v827 = vpop.f32.mrb[0].mxu0
        %v828 = vadd.f32 0.0, %v827
        %v829 = vpop.f32.mrb[0].mxu0
        %830 = vmatprep.mubr.f32.mxu0 0.0
        %831 = vmatmul.mubr.f32.gmra.mrb[0].mxu0 %v647
        %v832 = vpop.f32.mrb[0].mxu0
        %v833 = vadd.f32 0.0, %v832
        %v834 = vpop.f32.mrb[0].mxu0
        %835 = vmatprep.mubr.f32.mxu0 0.0
        %836 = vmatmul.mubr.f32.gmra.mrb[0].mxu0 %v650
        %v837 = vpop.f32.mrb[0].mxu0
        %v838 = vadd.f32 0.0, %v837
        %v839 = vpop.f32.mrb[0].mxu0
        %840 = vmatprep.mubr.f32.mxu0 0.0
        %841 = vmatmul.mubr.f32.gmra.mrb[0].mxu0 %v653
        %v842 = vpop.f32.mrb[0].mxu0
        %v843 = vadd.f32 0.0, %v842
        %v844 = vpop.f32.mrb[0].mxu0
        %845 = vmatprep.mubr.f32.mxu0 0.0
        %846 = vmatmul.mubr.f32.gmra.mrb[0].mxu0 %v656
        %v847 = vpop.f32.mrb[0].mxu0
        %v848 = vadd.f32 0.0, %v847
        %v849 = vpop.f32.mrb[0].mxu0
        %850 = vmatprep.mubr.f32.mxu0 0.0
        %851 = vmatmul.mubr.f32.gmra.mrb[0].mxu0 %v659
        %v852 = vpop.f32.mrb[0].mxu0
        %v853 = vadd.f32 0.0, %v852
        %v854 = vpop.f32.mrb[0].mxu0
        %855 = vmatprep.mubr.f32.mxu0 0.0
        %856 = vmatmul.mubr.f32.gmra.mrb[0].mxu0 %v662
        %v857 = vpop.f32.mrb[0].mxu0
        %v858 = vadd.f32 0.0, %v857
        %v859 = vpop.f32.mrb[0].mxu0
        %860 = vmatprep.mubr.f32.mxu0 0.0
        %861 = vmatmul.mubr.f32.gmra.mrb[0].mxu0 %v665
        %v862 = vpop.f32.mrb[0].mxu0
        %v863 = vadd.f32 0.0, %v862
        %v864 = vpop.f32.mrb[0].mxu0
        %865 = vmatprep.mubr.f32.mxu0 0.0
        %866 = vmatmul.mubr.f32.gmra.mrb[0].mxu0 %v668
        %v867 = vpop.f32.mrb[0].mxu0
        %v868 = vadd.f32 0.0, %v867
        %v869 = vpop.f32.mrb[0].mxu0
        %870 = vmatprep.mubr.f32.mxu0 0.0
        %871 = vmatmul.mubr.f32.gmra.mrb[0].mxu0 %v671
        %v872 = vpop.f32.mrb[0].mxu0
        %v873 = vadd.f32 0.0, %v872
        %v874 = vpop.f32.mrb[0].mxu0
        %875 = vmatprep.mubr.f32.mxu0 0.0
        %876 = vmatmul.mubr.f32.gmra.mrb[0].mxu0 %v674
        %v877 = vpop.f32.mrb[0].mxu0
        %v878 = vadd.f32 0.0, %v877
        %v879 = vpop.f32.mrb[0].mxu0
        %880 = vmatprep.mubr.f32.mxu0 0.0
        %881 = vmatmul.mubr.f32.gmra.mrb[0].mxu0 %v677
        %v882 = vpop.f32.mrb[0].mxu0
        %v883 = vadd.f32 0.0, %v882
        %v884 = vpop.f32.mrb[0].mxu0
        %885 = vmatprep.mubr.f32.mxu0 0.0
        %886 = vmatmul.mubr.f32.gmra.mrb[0].mxu0 %v680
        %v887 = vpop.f32.mrb[0].mxu0
        %v888 = vadd.f32 0.0, %v887
        %v889 = vpop.f32.mrb[0].mxu0
        %890 = vmatprep.mubr.f32.mxu0 0.0
        %891 = vmatmul.mubr.f32.gmra.mrb[0].mxu0 %v683
        %v892 = vpop.f32.mrb[0].mxu0
        %v893 = vadd.f32 0.0, %v892
        %v894 = vpop.f32.mrb[0].mxu0
        %895 = vmatprep.mubr.f32.mxu0 0.0
        %896 = vmatmul.mubr.f32.gmra.mrb[0].mxu0 %v686
        %v897 = vpop.f32.mrb[0].mxu0
        %v898 = vadd.f32 0.0, %v897
        %v899 = vpop.f32.mrb[0].mxu0
        %900 = vmatprep.mubr.f32.mxu0 0.0
        %901 = vmatmul.mubr.f32.gmra.mrb[0].mxu0 %v689
        %v902 = vpop.f32.mrb[0].mxu0
        %v903 = vadd.f32 0.0, %v902
        %v904 = vpop.f32.mrb[0].mxu0
        %905 = vmatprep.mubr.f32.mxu0 0.0
        %906 = vmatmul.mubr.f32.gmra.mrb[0].mxu0 %v692
        %v907 = vpop.f32.mrb[0].mxu0
        %v908 = vadd.f32 0.0, %v907
        %v909 = vpop.f32.mrb[0].mxu0
        %910 = vmatprep.mubr.f32.mxu0 0.0
        %911 = vmatmul.mubr.f32.gmra.mrb[0].mxu0 %v695
        %v912 = vpop.f32.mrb[0].mxu0
        %v913 = vadd.f32 0.0, %v912
        %v914 = vpop.f32.mrb[0].mxu0
        %915 = vmatprep.mubr.f32.mxu0 0.0
        %916 = vmatmul.mubr.f32.gmra.mrb[0].mxu0 %v698
        %v917 = vpop.f32.mrb[0].mxu0
        %v918 = vadd.f32 0.0, %v917
        %v919 = vpop.f32.mrb[0].mxu0
        %920 = vmatprep.mubr.f32.mxu0 0.0
        %921 = vmatmul.mubr.f32.gmra.mrb[0].mxu0 %v701
        %v922 = vpop.f32.mrb[0].mxu0
        %v923 = vadd.f32 0.0, %v922
        %v924 = vpop.f32.mrb[0].mxu0
        %925 = vmatprep.mubr.f32.mxu0 0.0
        %926 = vmatmul.mubr.f32.gmra.mrb[0].mxu0 %v704
        %v927 = vpop.f32.mrb[0].mxu0
        %v928 = vadd.f32 0.0, %v927
        %v929 = vpop.f32.mrb[0].mxu0
        %930 = vmatprep.mubr.f32.mxu0 0.0
        %931 = vmatmul.mubr.f32.gmra.mrb[0].mxu0 %v707
        %v932 = vpop.f32.mrb[0].mxu0
        %v933 = vadd.f32 0.0, %v932
        %v934 = vpop.f32.mrb[0].mxu0
        %935 = vmatprep.mubr.f32.mxu0 0.0
        %936 = vmatmul.mubr.f32.gmra.mrb[0].mxu0 %v710
        %v937 = vpop.f32.mrb[0].mxu0
        %v938 = vadd.f32 0.0, %v937
        %v939 = vpop.f32.mrb[0].mxu0
        %940 = vdwg.mxu0
        %v941 = vmax.f32 %v783, %v803
        %v942 = vmax.f32 %v788, %v808
        %v943 = vmax.f32 %v793, %v813
        %v944 = vmax.f32 %v798, %v818
        %v945 = vmax.f32 %v941, %v823
        %v946 = vmax.f32 %v942, %v828
        %v947 = vmax.f32 %v943, %v833
        %v948 = vmax.f32 %v944, %v838
        %v949 = vmax.f32 %v945, %v843
        %v950 = vmax.f32 %v946, %v848
        %v951 = vmax.f32 %v947, %v853
        %v952 = vmax.f32 %v948, %v858
        %v953 = vmax.f32 %v949, %v863
        %v954 = vmax.f32 %v950, %v868
        %v955 = vmax.f32 %v951, %v873
        %v956 = vmax.f32 %v952, %v878
        %v957 = vmax.f32 %v953, %v883
        %v958 = vmax.f32 %v954, %v888
        %v959 = vmax.f32 %v955, %v893
        %v960 = vmax.f32 %v956, %v898
        %v961 = vmax.f32 %v957, %v903
        %v962 = vmax.f32 %v958, %v908
        %v963 = vmax.f32 %v959, %v913
        %v964 = vmax.f32 %v960, %v918
        %v965 = vmax.f32 %v961, %v923
        %v966 = vmax.f32 %v962, %v928
        %v967 = vmax.f32 %v963, %v933
        %v968 = vmax.f32 %v964, %v938
        %v969 = vmax.f32 %v965, %v966
        %v970 = vmax.f32 %v967, %v968
        %v971 = vmax.f32 %v969, %v970
        %v972 = vrot.slane %v971, 4
        %v973 = vmax.f32 %v971, %v972
        %v974 = vrot.slane %v973, 2
        %v975 = vmax.f32 %v973, %v974
        %v976 = vrot.slane %v975, 1
        %v977 = vmax.f32 %v975, %v976
        %v978 = vsub.f32 %v783, %v977
        %v979 = vsub.f32 %v788, %v977
        %v980 = vsub.f32 %v793, %v977
        %v981 = vsub.f32 %v798, %v977
        %v982 = vsub.f32 %v803, %v977
        %v983 = vsub.f32 %v808, %v977
        %v984 = vsub.f32 %v813, %v977
        %v985 = vsub.f32 %v818, %v977
        %v986 = vsub.f32 %v823, %v977
        %v987 = vsub.f32 %v828, %v977
        %v988 = vsub.f32 %v833, %v977
        %v989 = vsub.f32 %v838, %v977
        %v990 = vsub.f32 %v843, %v977
        %v991 = vsub.f32 %v848, %v977
        %v992 = vsub.f32 %v853, %v977
        %v993 = vsub.f32 %v858, %v977
        %v994 = vsub.f32 %v863, %v977
        %v995 = vsub.f32 %v868, %v977
        %v996 = vsub.f32 %v873, %v977
        %v997 = vsub.f32 %v878, %v977
        %v998 = vsub.f32 %v883, %v977
        %v999 = vsub.f32 %v888, %v977
        %v1000 = vsub.f32 %v893, %v977
        %v1001 = vsub.f32 %v898, %v977
        %v1002 = vsub.f32 %v903, %v977
        %v1003 = vsub.f32 %v908, %v977
        %v1004 = vsub.f32 %v913, %v977
        %v1005 = vsub.f32 %v918, %v977
        %v1006 = vsub.f32 %v923, %v977
        %v1007 = vsub.f32 %v928, %v977
        %v1008 = vsub.f32 %v933, %v977
        %v1009 = vsub.f32 %v938, %v977
        %v1010 = vmul.f32 %v978, 1.442695
        %v1011 = vpow.pop %v1010
        %v1012 = vmul.f32 %v979, 1.442695
        %v1013 = vpow.pop %v1012
        %v1014 = vmul.f32 %v980, 1.442695
        %v1015 = vpow.pop %v1014
        %v1016 = vmul.f32 %v981, 1.442695
        %v1017 = vpow.pop %v1016
        %v1018 = vmul.f32 %v982, 1.442695
        %v1019 = vpow.pop %v1018
        %v1020 = vmul.f32 %v983, 1.442695
        %v1021 = vpow.pop %v1020
        %v1022 = vmul.f32 %v984, 1.442695
        %v1023 = vpow.pop %v1022
        %v1024 = vmul.f32 %v985, 1.442695
        %v1025 = vpow.pop %v1024
        %v1026 = vmul.f32 %v986, 1.442695
        %v1027 = vpow.pop %v1026
        %v1028 = vmul.f32 %v987, 1.442695
        %v1029 = vpow.pop %v1028
        %v1030 = vmul.f32 %v988, 1.442695
        %v1031 = vpow.pop %v1030
        %v1032 = vmul.f32 %v989, 1.442695
        %v1033 = vpow.pop %v1032
        %v1034 = vmul.f32 %v990, 1.442695
        %v1035 = vpow.pop %v1034
        %v1036 = vmul.f32 %v991, 1.442695
        %v1037 = vpow.pop %v1036
        %v1038 = vmul.f32 %v992, 1.442695
        %v1039 = vpow.pop %v1038
        %v1040 = vmul.f32 %v993, 1.442695
        %v1041 = vpow.pop %v1040
        %v1042 = vmul.f32 %v994, 1.442695
        %v1043 = vpow.pop %v1042
        %v1044 = vmul.f32 %v995, 1.442695
        %v1045 = vpow.pop %v1044
        %v1046 = vmul.f32 %v996, 1.442695
        %v1047 = vpow.pop %v1046
        %v1048 = vmul.f32 %v997, 1.442695
        %v1049 = vpow.pop %v1048
        %v1050 = vmul.f32 %v998, 1.442695
        %v1051 = vpow.pop %v1050
        %v1052 = vmul.f32 %v999, 1.442695
        %v1053 = vpow.pop %v1052
        %v1054 = vmul.f32 %v1000, 1.442695
        %v1055 = vpow.pop %v1054
        %v1056 = vmul.f32 %v1001, 1.442695
        %v1057 = vpow.pop %v1056
        %v1058 = vmul.f32 %v1002, 1.442695
        %v1059 = vpow.pop %v1058
        %v1060 = vmul.f32 %v1003, 1.442695
        %v1061 = vpow.pop %v1060
        %v1062 = vmul.f32 %v1004, 1.442695
        %v1063 = vpow.pop %v1062
        %v1064 = vmul.f32 %v1005, 1.442695
        %v1065 = vpow.pop %v1064
        %v1066 = vmul.f32 %v1006, 1.442695
        %v1067 = vpow.pop %v1066
        %v1068 = vmul.f32 %v1007, 1.442695
        %v1069 = vpow.pop %v1068
        %v1070 = vmul.f32 %v1008, 1.442695
        %v1071 = vpow.pop %v1070
        %v1072 = vmul.f32 %v1009, 1.442695
        %v1073 = vpow.pop %v1072
        %v1074 = vadd.f32 %v1011, %v1013
        %v1075 = vadd.f32 %v1074, %v1015
        %v1076 = vadd.f32 %v1075, %v1017
        %v1077 = vadd.f32 %v1076, %v1019
        %v1078 = vadd.f32 %v1077, %v1021
        %v1079 = vadd.f32 %v1078, %v1023
        %v1080 = vadd.f32 %v1079, %v1025
        %v1081 = vadd.f32 %v1080, %v1027
        %v1082 = vadd.f32 %v1081, %v1029
        %v1083 = vadd.f32 %v1082, %v1031
        %v1084 = vadd.f32 %v1083, %v1033
        %v1085 = vadd.f32 %v1084, %v1035
        %v1086 = vadd.f32 %v1085, %v1037
        %v1087 = vadd.f32 %v1086, %v1039
        %v1088 = vadd.f32 %v1087, %v1041
        %v1089 = vadd.f32 %v1088, %v1043
        %v1090 = vadd.f32 %v1089, %v1045
        %v1091 = vadd.f32 %v1090, %v1047
        %v1092 = vadd.f32 %v1091, %v1049
        %v1093 = vadd.f32 %v1092, %v1051
        %v1094 = vadd.f32 %v1093, %v1053
        %v1095 = vadd.f32 %v1094, %v1055
        %v1096 = vadd.f32 %v1095, %v1057
        %v1097 = vadd.f32 %v1096, %v1059
        %v1098 = vadd.f32 %v1097, %v1061
        %v1099 = vadd.f32 %v1098, %v1063
        %v1100 = vadd.f32 %v1099, %v1065
        %v1101 = vadd.f32 %v1100, %v1067
        %v1102 = vadd.f32 %v1101, %v1069
        %v1103 = vadd.f32 %v1102, %v1071
        %v1104 = vadd.f32 %v1103, %v1073
        %v1105 = vrot.slane %v1104, 4
        %v1106 = vadd.f32 %v1104, %v1105
        %v1107 = vrot.slane %v1106, 2
        %v1108 = vadd.f32 %v1106, %v1107
        %v1109 = vrot.slane %v1108, 1
        %v1110 = vadd.f32 %v1108, %v1109
        %v1111 = vrcp.pop %v1110
        %v1112 = vmul.f32 %v1011, %v1111
        %v1113 = vmul.f32 %v1013, %v1111
        %v1114 = vmul.f32 %v1015, %v1111
        %v1115 = vmul.f32 %v1017, %v1111
        %v1116 = vmul.f32 %v1019, %v1111
        %v1117 = vmul.f32 %v1021, %v1111
        %v1118 = vmul.f32 %v1023, %v1111
        %v1119 = vmul.f32 %v1025, %v1111
        %v1120 = vmul.f32 %v1027, %v1111
        %v1121 = vmul.f32 %v1029, %v1111
        %v1122 = vmul.f32 %v1031, %v1111
        %v1123 = vmul.f32 %v1033, %v1111
        %v1124 = vmul.f32 %v1035, %v1111
        %v1125 = vmul.f32 %v1037, %v1111
        %v1126 = vmul.f32 %v1039, %v1111
        %v1127 = vmul.f32 %v1041, %v1111
        %v1128 = vmul.f32 %v1043, %v1111
        %v1129 = vmul.f32 %v1045, %v1111
        %v1130 = vmul.f32 %v1047, %v1111
        %v1131 = vmul.f32 %v1049, %v1111
        %v1132 = vmul.f32 %v1051, %v1111
        %v1133 = vmul.f32 %v1053, %v1111
        %v1134 = vmul.f32 %v1055, %v1111
        %v1135 = vmul.f32 %v1057, %v1111
        %v1136 = vmul.f32 %v1059, %v1111
        %v1137 = vmul.f32 %v1061, %v1111
        %v1138 = vmul.f32 %v1063, %v1111
        %v1139 = vmul.f32 %v1065, %v1111
        %v1140 = vmul.f32 %v1067, %v1111
        %v1141 = vmul.f32 %v1069, %v1111
        %v1142 = vmul.f32 %v1071, %v1111
        %v1143 = vmul.f32 %v1073, %v1111
        %v1144 = vld [vmem:[#allocation3] sm:$0xff]
        %v1145 = vld [vmem:[#allocation3 + $0x8] sm:$0xff]
        %v1146 = vld [vmem:[#allocation3 + $0x10] sm:$0xff]
        %v1147 = vld [vmem:[#allocation3 + $0x18] sm:$0xff]
        %v1148 = vld [vmem:[#allocation3 + $0x20] sm:$0xff]
        %v1149 = vld [vmem:[#allocation3 + $0x28] sm:$0xff]
        %v1150 = vld [vmem:[#allocation3 + $0x30] sm:$0xff]
        %v1151 = vld [vmem:[#allocation3 + $0x38] sm:$0xff]
        %1152 = vmatprep.subr.mxu0 0.0
        %1153 = vmatpush1.msra.mxu0 %v1112
        %1154 = vmatprep.subr.mxu0 0.0
        %1155 = vmatpush1.msra.mxu0 %v1113
        %1156 = vmatprep.subr.mxu0 0.0
        %1157 = vmatpush1.msra.mxu0 %v1114
        %1158 = vmatprep.subr.mxu0 0.0
        %1159 = vmatpush1.msra.mxu0 %v1115
        %1160 = vmatprep.subr.mxu0 0.0
        %1161 = vmatpush1.msra.mxu0 %v1116
        %1162 = vmatprep.subr.mxu0 0.0
        %1163 = vmatpush1.msra.mxu0 %v1117
        %1164 = vmatprep.subr.mxu0 0.0
        %1165 = vmatpush1.msra.mxu0 %v1118
        %1166 = vmatprep.subr.mxu0 0.0
        %1167 = vmatpush1.msra.mxu0 %v1119
        %1168 = vmatprep.subr.mxu0 0.0
        %1169 = vmatpush1.msra.mxu0 %v1120
        %1170 = vmatprep.subr.mxu0 0.0
        %1171 = vmatpush1.msra.mxu0 %v1121
        %1172 = vmatprep.subr.mxu0 0.0
        %1173 = vmatpush1.msra.mxu0 %v1122
        %1174 = vmatprep.subr.mxu0 0.0
        %1175 = vmatpush1.msra.mxu0 %v1123
        %1176 = vmatprep.subr.mxu0 0.0
        %1177 = vmatpush1.msra.mxu0 %v1124
        %1178 = vmatprep.subr.mxu0 0.0
        %1179 = vmatpush1.msra.mxu0 %v1125
        %1180 = vmatprep.subr.mxu0 0.0
        %1181 = vmatpush1.msra.mxu0 %v1126
        %1182 = vmatprep.subr.mxu0 0.0
        %1183 = vmatpush1.msra.mxu0 %v1127
        %1184 = vmatprep.subr.mxu0 0.0
        %1185 = vmatpush1.msra.mxu0 %v1128
        %1186 = vmatprep.subr.mxu0 0.0
        %1187 = vmatpush1.msra.mxu0 %v1129
        %1188 = vmatprep.subr.mxu0 0.0
        %1189 = vmatpush1.msra.mxu0 %v1130
        %1190 = vmatprep.subr.mxu0 0.0
        %1191 = vmatpush1.msra.mxu0 %v1131
        %1192 = vmatprep.subr.mxu0 0.0
        %1193 = vmatpush1.msra.mxu0 %v1132
        %1194 = vmatprep.subr.mxu0 0.0
        %1195 = vmatpush1.msra.mxu0 %v1133
        %1196 = vmatprep.subr.mxu0 0.0
        %1197 = vmatpush1.msra.mxu0 %v1134
        %1198 = vmatprep.subr.mxu0 0.0
        %1199 = vmatpush1.msra.mxu0 %v1135
        %1200 = vmatprep.subr.mxu0 0.0
        %1201 = vmatpush1.msra.mxu0 %v1136
        %1202 = vmatprep.subr.mxu0 0.0
        %1203 = vmatpush1.msra.mxu0 %v1137
        %1204 = vmatprep.subr.mxu0 0.0
        %1205 = vmatpush1.msra.mxu0 %v1138
        %1206 = vmatprep.subr.mxu0 0.0
        %1207 = vmatpush1.msra.mxu0 %v1139
        %1208 = vmatprep.subr.mxu0 0.0
        %1209 = vmatpush1.msra.mxu0 %v1140
        %1210 = vmatprep.subr.mxu0 0.0
        %1211 = vmatpush1.msra.mxu0 %v1141
        %1212 = vmatprep.subr.mxu0 0.0
        %1213 = vmatpush1.msra.mxu0 %v1142
        %1214 = vmatprep.subr.mxu0 0.0
        %1215 = vmatpush1.msra.mxu0 %v1143
        %1216 = vmatprep.mubr.f32.mxu0 %v1145
        %1217 = vmatmul.mubr.f32.gmra.mrb[0].mxu0 %v1144
        %v1218 = vpop.f32.mrb[0].mxu0
        %v1219 = vadd.f32 0.0, %v1218
        %v1220 = vpop.f32.mrb[0].mxu0
        %1221 = vmatprep.mubr.f32.mxu0 %v1147
        %1222 = vmatmul.mubr.f32.gmra.mrb[0].mxu0 %v1146
        %v1223 = vpop.f32.mrb[0].mxu0
        %v1224 = vadd.f32 0.0, %v1223
        %v1225 = vpop.f32.mrb[0].mxu0
        %1226 = vmatprep.mubr.f32.mxu0 %v1149
        %1227 = vmatmul.mubr.f32.gmra.mrb[0].mxu0 %v1148
        %v1228 = vpop.f32.mrb[0].mxu0
        %v1229 = vadd.f32 0.0, %v1228
        %v1230 = vpop.f32.mrb[0].mxu0
        %1231 = vmatprep.mubr.f32.mxu0 %v1151
        %1232 = vmatmul.mubr.f32.gmra.mrb[0].mxu0 %v1150
        %v1233 = vpop.f32.mrb[0].mxu0
        %v1234 = vadd.f32 0.0, %v1233
        %v1235 = vpop.f32.mrb[0].mxu0
        %1236 = vdwg.mxu0
        %1237 = vst [vmem:[%s256] sm:$0xff] %v1219
        %1238 = vst [vmem:[%s256 + $0x8] sm:$0xff] %v1224
        %1239 = vst [vmem:[%s256 + $0x10] sm:$0xff] %v1229
        %1240 = vst [vmem:[%s256 + $0x18] sm:$0xff] %v1234
        %s1241 = sand.u32 %s133, 1
        %s1242 = scalar_lea.sflag [#allocation6], %s1241
        %s1243 = sand.u32 %s133, 1
        %s1244 = smul.addr %s1243, 32
        %s1245 = scalar_lea.vmem [#allocation10], %s1244
        // Predicated region
        $region53: #{tpu_custom_call.1} parent=35 // pred_check
          %p1246 = pneg %p143
        $region54: #{tpu_custom_call.1} parent=35 // pred_check_branch
          %1248 = sbr.rel (%p1246) target = $region56
        $region55: #{tpu_custom_call.1} parent=35 // pred_region
          %s1250 = ssub.s32 512, 512
          %1251 = vsyncadd %s1242, %s1250
          %s1252 = smul.addr %s26, 8
          %s1253 = sadd.s32 %s27, %s1252
          %s1254 = smul.addr %s1253, 128
          %s1255 = scalar_lea.hbm %s4, %s1254
          %s1256 = sshll.u32 %s1245, 4
          %s1257 = int_to_ptr.vmem [resolvable:$true] %s1256
          %1262 = dma.vmem_to_hbm [thread:$0]  %s1257, 512, %s1255, %s1242, 128, 256, 8
        $region56: #{tpu_custom_call.1} parent=35 // pred_fallthru
          _
      $region36: #{tpu_custom_call.1} parent=5 // pred_fallthru
        _
      %p1263 = scmp.le.s32.totalorder 2, %s17
      // Predicated region
      $region57: #{tpu_custom_call.1} parent=5 // pred_check
        %p1264 = pneg %p1263
      $region58: #{tpu_custom_call.1} parent=5 // pred_check_branch
        %1266 = sbr.rel (%p1264) target = $region60
      $region59: #{tpu_custom_call.1} parent=5 // pred_region
        %s1267 = ssub.s32 %s17, 2
        // Predicated region
        $region61: #{tpu_custom_call.1} parent=59 // pred_check
          %p1268 = pneg %p149
        $region62: #{tpu_custom_call.1} parent=59 // pred_check_branch
          %1270 = sbr.rel (%p1268) target = $region64
        $region63: #{tpu_custom_call.1} parent=59 // pred_region
          %s1271 = sand.u32 %s134, 1
          %s1272 = scalar_lea.sflag [#allocation6], %s1271
          %s1273 = sand.u32 %s134, 1
          %s1274 = smul.addr %s1273, 32
          %s1275 = scalar_lea.vmem [#allocation10], %s1274
          %1276 = dma.done %s1272, 512
        $region64: #{tpu_custom_call.1} parent=59 // pred_fallthru
          _
      $region60: #{tpu_custom_call.1} parent=5 // pred_fallthru
        _
    $region6: #{tpu_custom_call.1} parent=1 // loop_footer
      %s21 = sadd.s32 1, %s17
    $region7: #{tpu_custom_call.1} parent=1 // loop_footer_branch
      %16 = sbr.rel target = $region3
    $region8: #{tpu_custom_call.1} parent=1 // loop_exit
      _
    %1277 = vsyncpa [#allocation5], 1
    %s1278 = scalar_lea.sflag [#allocation5], 1
    %1279 = vsyncpa %s1278, 1
    %1280 = vsyncpa [#allocation8], 1
    %1281 = vsyncpa [#allocation6], 1
    %s1282 = scalar_lea.sflag [#allocation6], 1
    %1283 = vsyncpa %s1282, 1

</llo_original>
